<compile_context>
chip_gen: v7x
topology: tpu7x:2x2x1
jax: 0.10.0
libtpu: 0.0.40
codegen_flags: <defaults>
</compile_context>

<pallas_src>
import functools

import jax
import jax.numpy as jnp
from jax.experimental import pallas as pl
from jax.experimental.pallas import tpu as pltpu

LANE = 128
SUBLANE = 8
TARGET_TILE_ROWS = 512   # 512-1024 is the sweet spot; 512 keeps v5e spill pressure low


def _round_up(x, m):
    return ((x + m - 1) // m) * m


# ----------------------------------------------------------------------------
# Parameter initialization (deterministic; mimics nn.init.orthogonal_ via QR).
# Biases get small random values (PyTorch inits them to zero, but random biases
# make the check exercise the bias-packing path; forward semantics unchanged).
# ----------------------------------------------------------------------------
def orthogonal_init(key, shape, dtype=jnp.float32):
    n_rows, n_cols = shape
    big, small = max(n_rows, n_cols), min(n_rows, n_cols)
    a = jax.random.normal(key, (big, small), dtype=jnp.float32)
    q, r = jnp.linalg.qr(a)
    q = q * jnp.sign(jnp.diagonal(r))[None, :]
    if n_rows < n_cols:
        q = q.T
    return q[:n_rows, :n_cols].astype(dtype)


def init_dynamics_params(key, layer_sizes):
    """Same parameter set as Dynamics.__init__ with dotp=True."""
    s_dim = layer_sizes[-1]
    a_dim = layer_sizes[0] - s_dim
    n_layers = len(layer_sizes) - 1

    weights, biases = [], []
    s_weights, s_biases, a_weights, a_biases = [], [], [], []

    keys = jax.random.split(key, 6 * n_layers)
    k = iter(range(6 * n_layers))
    for i in range(n_layers):
        dim0 = layer_sizes[i]
        dim1 = layer_sizes[i + 1]
        if i == 0:
            dim0 = layer_sizes[0] + layer_sizes[-2]
        weights.append(orthogonal_init(keys[next(k)], (dim0, dim1)))
        biases.append(0.01 * jax.random.normal(keys[next(k)], (1, dim1), jnp.float32))
        if i == n_layers - 1:
            break
        s_dim0 = s_dim if i == 0 else layer_sizes[i]
        a_dim0 = a_dim if i == 0 else layer_sizes[i]
        s_weights.append(orthogonal_init(keys[next(k)], (s_dim0, dim1)))
        a_weights.append(orthogonal_init(keys[next(k)], (a_dim0, dim1)))
        s_biases.append(0.01 * jax.random.normal(keys[next(k)], (1, dim1), jnp.float32))
        a_biases.append(0.01 * jax.random.normal(keys[next(k)], (1, dim1), jnp.float32))

    return dict(weights=weights, biases=biases,
                s_weights=s_weights, s_biases=s_biases,
                a_weights=a_weights, a_biases=a_biases)


# ----------------------------------------------------------------------------
# Host-side parameter packing: 1 bf16 weight slab + 1 f32 bias slab + metadata.
# ----------------------------------------------------------------------------
def pack_dynamics_params(params, layer_sizes):
    s_dim = layer_sizes[-1]
    a_dim = layer_sizes[0] - s_dim
    in_dim = s_dim + a_dim

    s_ws, s_bs = params["s_weights"], params["s_biases"]
    a_ws, a_bs = params["a_weights"], params["a_biases"]
    ws, bs = params["weights"], params["biases"]
    n_sa, n_main = len(s_ws), len(ws)
    assert n_main >= 2 and n_sa == n_main - 1
    assert s_ws[-1].shape[1] == a_ws[-1].shape[1]

    packed_w = []     # 2-D arrays placed at 8-row-aligned offsets, column 0
    bias_rows = []    # 1-D arrays, one slab row each

    # (1) fused block-diagonal s/a layers: one matmul per layer on [s | a]
    for i in range(n_sa):
        sw, aw = s_ws[i], a_ws[i]
        ks, ns = sw.shape
        ka, na = aw.shape
        w = jnp.zeros((ks + ka, ns + na), jnp.float32)
        w = w.at[:ks, :ns].set(sw)
        w = w.at[ks:, ns:].set(aw)
        packed_w.append(w)
        bias_rows.append(jnp.concatenate([s_bs[i][0], a_bs[i][0]], axis=0))

    # (2) first main layer split row-wise: [state|action] part and (s*a) part
    w0 = ws[0]
    packed_w.append(w0[:in_dim, :])     # acts on the raw [state | action] input
    packed_w.append(w0[in_dim:, :])     # acts on s * a
    bias_rows.append(bs[0][0])

    # (3) remaining main layers (last one kept at its REAL output width)
    out_dim = ws[-1].shape[1]
    for i in range(1, n_main):
        packed_w.append(ws[i])
        bias_rows.append(bs[i][0])

    slab_cols = _round_up(max(w.shape[1] for w in packed_w), LANE)

    offsets, r = [], 0
    for w in packed_w:
        offsets.append(r)
        r += _round_up(w.shape[0], SUBLANE)
    total_rows = _round_up(r, SUBLANE)

    w_slab = jnp.zeros((total_rows, slab_cols), jnp.float32)
    for off, w in zip(offsets, packed_w):
        w_slab = w_slab.at[off:off + w.shape[0], :w.shape[1]].set(w)
    w_slab = w_slab.astype(jnp.bfloat16)   # MXU operands in bf16

    b_slab = jnp.zeros((_round_up(len(bias_rows), SUBLANE), slab_cols), jnp.float32)
    for j, b in enumerate(bias_rows):
        b_slab = b_slab.at[j, :b.shape[0]].set(b)

    def entry(idx, bias_row):
        return (offsets[idx], packed_w[idx].shape[0], packed_w[idx].shape[1], bias_row)

    meta = dict(
        in_dim=in_dim,
        out_dim=out_dim,
        sa_half=s_ws[-1].shape[1],
        sa_layers=tuple(entry(i, i) for i in range(n_sa)),
        main0_inp=entry(n_sa, n_sa),
        main0_prod=entry(n_sa + 1, n_sa),
        main_rest=tuple(entry(n_sa + 2 + j, n_sa + 1 + j) for j in range(n_main - 1)),
    )
    return w_slab, b_slab, meta


# ----------------------------------------------------------------------------
# Pallas kernel: full forward pass; all parameters come from two VMEM slabs.
# bf16 matmul operands, f32 accumulation / bias / ReLU / s*a.
# ----------------------------------------------------------------------------
def _dynamics_kernel(meta, inp_ref, w_ref, b_ref, out_ref):
    x_in = inp_ref[...]                                   # (TB, s_dim + a_dim) f32

    # Fused s/a path: one block-diagonal bf16 matmul per layer on [s | a].
    sa = x_in
    for r0, k, n, brow in meta["sa_layers"]:
        sa = (jnp.dot(sa.astype(jnp.bfloat16), w_ref[r0:r0 + k, 0:n],
                      preferred_element_type=jnp.float32)
              + b_ref[brow:brow + 1, 0:n])

    half = meta["sa_half"]
    prod = sa[:, 0:half] * sa[:, half:2 * half]           # s * a (f32, VPU)

    # First main layer without the lane concat: split-weight matmuls summed in f32.
    r0, k, n0, brow = meta["main0_inp"]
    rp, kp, _, _ = meta["main0_prod"]
    x = (jnp.dot(x_in.astype(jnp.bfloat16), w_ref[r0:r0 + k, 0:n0],
                 preferred_element_type=jnp.float32)
         + jnp.dot(prod.astype(jnp.bfloat16), w_ref[rp:rp + kp, 0:n0],
                   preferred_element_type=jnp.float32)
         + b_ref[brow:brow + 1, 0:n0])
    x = jnp.maximum(x, 0.0)

    rest = meta["main_rest"]
    for j, (r0, k, n, brow) in enumerate(rest):
        x = (jnp.dot(x.astype(jnp.bfloat16), w_ref[r0:r0 + k, 0:n],
                     preferred_element_type=jnp.float32)
             + b_ref[brow:brow + 1, 0:n])
        if j < len(rest) - 1:
            x = jnp.maximum(x, 0.0)

    out_ref[...] = x.astype(out_ref.dtype)                # (TB, out_dim), real width


# ----------------------------------------------------------------------------
# Wrapper reproducing Dynamics.forward (dotp=True).
# ----------------------------------------------------------------------------
def dynamics_forward(state, action, w_slab, b_slab, meta):
    state = jnp.asarray(state, jnp.float32)
    action = jnp.asarray(action, jnp.float32)
    # replicate the broadcast-repeat logic from the PyTorch forward (no copy)
    if state.shape[0] == 1 and action.shape[0] != 1:
        state = jnp.broadcast_to(state, (action.shape[0], state.shape[1]))
    if action.shape[0] == 1 and state.shape[0] != 1:
        action = jnp.broadcast_to(action, (state.shape[0], action.shape[1]))
    batch = state.shape[0]

    # TODO(synk): state/action could be passed as two separate inputs (splitting the
    # first block-diag weight) to skip this tiny HBM concat; only matters at huge B.
    inp = jnp.concatenate([state, action], axis=1)        # (B, s_dim + a_dim)

    # Batch tiling:
    #   * target ~512 rows/step (high HBM-roofline utilisation, safe on v5e),
    #   * >=2 grid steps whenever batch >= 16 so v7x's 2 TensorCores both work,
    #   * tile_b chosen from ceil(batch / n_steps) to minimise padded rows.
    if batch >= 2 * SUBLANE:
        n_steps = max(2, pl.cdiv(batch, TARGET_TILE_ROWS))
    else:
        n_steps = 1
    tile_b = _round_up(pl.cdiv(batch, n_steps), SUBLANE)
    b_pad = _round_up(batch, tile_b)
    if b_pad != batch:
        inp = jnp.pad(inp, ((0, b_pad - batch), (0, 0)))

    in_dim, out_dim = meta["in_dim"], meta["out_dim"]
    wr, wc = w_slab.shape
    br, bc = b_slab.shape

    out = pl.pallas_call(
        functools.partial(_dynamics_kernel, meta),
        out_shape=jax.ShapeDtypeStruct((b_pad, out_dim), jnp.float32),
        grid=(b_pad // tile_b,),
        in_specs=[
            pl.BlockSpec((tile_b, in_dim), lambda i: (i, 0)),
            pl.BlockSpec((wr, wc), lambda i: (0, 0)),      # resident bf16 weight slab
            pl.BlockSpec((br, bc), lambda i: (0, 0)),      # resident f32 bias slab
        ],
        # last dim == full array dim -> legal block shape, no 128-lane padding
        out_specs=pl.BlockSpec((tile_b, out_dim), lambda i: (i, 0)),
        compiler_params=pltpu.CompilerParams(
            dimension_semantics=("parallel",)),
    )(inp, w_slab, b_slab)

    if b_pad != batch:
        out = out[:batch]
    return out


# ----------------------------------------------------------------------------
# Pure-JAX reference for verification (original, unpacked semantics).
# matmul_dtype=jnp.bfloat16 mirrors the kernel's bf16 MXU operands.
# ----------------------------------------------------------------------------
def dynamics_forward_ref(state, action, params, matmul_dtype=None):
    def mm(x, w):
        if matmul_dtype is not None:
            return jnp.dot(x.astype(matmul_dtype), w.astype(matmul_dtype),
                           preferred_element_type=jnp.float32)
        return x @ w

    state = jnp.asarray(state, jnp.float32)
    action = jnp.asarray(action, jnp.float32)
    if state.shape[0] == 1 and action.shape[0] != 1:
        state = jnp.broadcast_to(state, (action.shape[0], state.shape[1]))
    if action.shape[0] == 1 and state.shape[0] != 1:
        action = jnp.broadcast_to(action, (state.shape[0], action.shape[1]))
    s, a = state, action
    for s_w, s_b, a_w, a_b in zip(params["s_weights"], params["s_biases"],
                                  params["a_weights"], params["a_biases"]):
        s = mm(s, s_w) + s_b
        a = mm(a, a_w) + a_b
    x = jnp.concatenate([state, action, s * a], axis=1)
    n = len(params["weights"])
    for i, (w, b) in enumerate(zip(params["weights"], params["biases"])):
        x = mm(x, w) + b
        if i < n - 1:
            x = jnp.maximum(x, 0.0)
    return x


if __name__ == "__main__":
    # Small shapes consistent with the module: s_dim=8, a_dim=4, hidden=32
    s_dim, a_dim, hidden = 8, 4, 32
    layer_sizes = [s_dim + a_dim, hidden, hidden, s_dim]

    key = jax.random.PRNGKey(0)
    k_params, k_data = jax.random.split(key)

    params = init_dynamics_params(k_params, layer_sizes)
    w_slab, b_slab, meta = pack_dynamics_params(params, layer_sizes)

    # batch=8 exercises the single-tile path; batch=200 exercises the
    # multi-step grid (2 steps, minimal row padding).
    for batch in (8, 200):
        ks, ka = jax.random.split(jax.random.fold_in(k_data, batch))
        state = jax.random.normal(ks, (batch, s_dim), jnp.float32)
        action = jax.random.normal(ka, (batch, a_dim), jnp.float32)

        out = dynamics_forward(state, action, w_slab, b_slab, meta)
        out = jax.block_until_ready(out)
        assert out.shape == (batch, s_dim)

        ref_bf16 = dynamics_forward_ref(state, action, params,
                                        matmul_dtype=jnp.bfloat16)
        ref_f32 = dynamics_forward_ref(state, action, params)
        assert jnp.allclose(out, ref_bf16, atol=2e-3, rtol=2e-3), \
            "mismatch vs bf16-matmul reference"
        assert jnp.allclose(out, ref_f32, atol=7.5e-2, rtol=7.5e-2), \
            "mismatch vs f32 reference"

    print("KERNEL_OK")
</pallas_src>

<mosaic_0001>
module attributes {stable_mosaic.version = 11 : i64} {
  func.func @_dynamics_kernel(%arg0: i32, %arg1: memref<8x12xf32, #tpu.memory_space<vmem>>, %arg2: memref<192x128xbf16, #tpu.memory_space<vmem>>, %arg3: memref<8x128xf32, #tpu.memory_space<vmem>>, %arg4: memref<8x8xf32, #tpu.memory_space<vmem>>) attributes {dimension_semantics = [#tpu.dimension_semantics<parallel>], iteration_bounds = array<i64: 1>, scalar_prefetch = 0 : i64, scratch_operands = 0 : i64, tpu.core_type = #tpu.core_type<tc>, window_params = [{transform_indices = @transform_0, window_bounds = array<i64: 8, 12>}, {pipeline_mode = #tpu.pipeline_mode<synchronous>, transform_indices = @transform_1, window_bounds = array<i64: 192, 128>}, {pipeline_mode = #tpu.pipeline_mode<synchronous>, transform_indices = @transform_2, window_bounds = array<i64: 8, 128>}, {transform_indices = @transform_3, window_bounds = array<i64: 8, 8>}]} {
    %c0 = arith.constant 0 : index
    %c0_0 = arith.constant 0 : index
    %0 = vector.load %arg1[%c0, %c0_0] : memref<8x12xf32, #tpu.memory_space<vmem>>, vector<8x12xf32>
    %1 = arith.truncf %0 : vector<8x12xf32> to vector<8x12xbf16>
    %c0_1 = arith.constant 0 : index
    %c0_2 = arith.constant 0 : index
    %2 = vector.load %arg2[%c0_1, %c0_2] : memref<192x128xbf16, #tpu.memory_space<vmem>>, vector<12x64xbf16>
    %cst = arith.constant dense<0.000000e+00> : vector<8x64xf32>
    %3 = tpu.matmul %1, %2, %cst {dimension_numbers = #tpu.dot_dimension_numbers<[1], [0], [0], [1], [0, 0, 1, 1], [], []>} : vector<8x12xbf16>, vector<12x64xbf16>, vector<8x64xf32> -> vector<8x64xf32>
    %c0_3 = arith.constant 0 : index
    %c0_4 = arith.constant 0 : index
    %4 = vector.load %arg3[%c0_3, %c0_4] : memref<8x128xf32, #tpu.memory_space<vmem>>, vector<1x64xf32>
    %5 = vector.broadcast %4 : vector<1x64xf32> to vector<8x64xf32>
    %6 = arith.addf %3, %5 : vector<8x64xf32>
    %7 = arith.truncf %6 : vector<8x64xf32> to vector<8x64xbf16>
    %c16 = arith.constant 16 : index
    %c0_5 = arith.constant 0 : index
    %8 = vector.load %arg2[%c16, %c0_5] : memref<192x128xbf16, #tpu.memory_space<vmem>>, vector<64x64xbf16>
    %cst_6 = arith.constant dense<0.000000e+00> : vector<8x64xf32>
    %9 = tpu.matmul %7, %8, %cst_6 {dimension_numbers = #tpu.dot_dimension_numbers<[1], [0], [0], [1], [0, 0, 1, 1], [], []>} : vector<8x64xbf16>, vector<64x64xbf16>, vector<8x64xf32> -> vector<8x64xf32>
    %c1 = arith.constant 1 : index
    %c0_7 = arith.constant 0 : index
    %10 = vector.load %arg3[%c1, %c0_7] : memref<8x128xf32, #tpu.memory_space<vmem>>, vector<1x64xf32>
    %11 = vector.broadcast %10 : vector<1x64xf32> to vector<8x64xf32>
    %12 = arith.addf %9, %11 : vector<8x64xf32>
    %13 = vector.extract_strided_slice %12 {offsets = [0, 0], sizes = [8, 32], strides = [1, 1]} : vector<8x64xf32> to vector<8x32xf32>
    %14 = vector.extract_strided_slice %12 {offsets = [0, 32], sizes = [8, 32], strides = [1, 1]} : vector<8x64xf32> to vector<8x32xf32>
    %15 = arith.mulf %13, %14 : vector<8x32xf32>
    %16 = arith.truncf %0 : vector<8x12xf32> to vector<8x12xbf16>
    %c80 = arith.constant 80 : index
    %c0_8 = arith.constant 0 : index
    %17 = vector.load %arg2[%c80, %c0_8] : memref<192x128xbf16, #tpu.memory_space<vmem>>, vector<12x32xbf16>
    %cst_9 = arith.constant dense<0.000000e+00> : vector<8x32xf32>
    %18 = tpu.matmul %16, %17, %cst_9 {dimension_numbers = #tpu.dot_dimension_numbers<[1], [0], [0], [1], [0, 0, 1, 1], [], []>} : vector<8x12xbf16>, vector<12x32xbf16>, vector<8x32xf32> -> vector<8x32xf32>
    %19 = arith.truncf %15 : vector<8x32xf32> to vector<8x32xbf16>
    %c96 = arith.constant 96 : index
    %c0_10 = arith.constant 0 : index
    %20 = vector.load %arg2[%c96, %c0_10] : memref<192x128xbf16, #tpu.memory_space<vmem>>, vector<32x32xbf16>
    %cst_11 = arith.constant dense<0.000000e+00> : vector<8x32xf32>
    %21 = tpu.matmul %19, %20, %cst_11 {dimension_numbers = #tpu.dot_dimension_numbers<[1], [0], [0], [1], [0, 0, 1, 1], [], []>} : vector<8x32xbf16>, vector<32x32xbf16>, vector<8x32xf32> -> vector<8x32xf32>
    %22 = arith.addf %18, %21 : vector<8x32xf32>
    %c2 = arith.constant 2 : index
    %c0_12 = arith.constant 0 : index
    %23 = vector.load %arg3[%c2, %c0_12] : memref<8x128xf32, #tpu.memory_space<vmem>>, vector<1x32xf32>
    %24 = vector.broadcast %23 : vector<1x32xf32> to vector<8x32xf32>
    %25 = arith.addf %22, %24 : vector<8x32xf32>
    %cst_13 = arith.constant 0.000000e+00 : f32
    %26 = vector.broadcast %cst_13 : f32 to vector<8x32xf32>
    %27 = arith.maximumf %25, %26 : vector<8x32xf32>
    %28 = arith.truncf %27 : vector<8x32xf32> to vector<8x32xbf16>
    %c128 = arith.constant 128 : index
    %c0_14 = arith.constant 0 : index
    %29 = vector.load %arg2[%c128, %c0_14] : memref<192x128xbf16, #tpu.memory_space<vmem>>, vector<32x32xbf16>
    %cst_15 = arith.constant dense<0.000000e+00> : vector<8x32xf32>
    %30 = tpu.matmul %28, %29, %cst_15 {dimension_numbers = #tpu.dot_dimension_numbers<[1], [0], [0], [1], [0, 0, 1, 1], [], []>} : vector<8x32xbf16>, vector<32x32xbf16>, vector<8x32xf32> -> vector<8x32xf32>
    %c3 = arith.constant 3 : index
    %c0_16 = arith.constant 0 : index
    %31 = vector.load %arg3[%c3, %c0_16] : memref<8x128xf32, #tpu.memory_space<vmem>>, vector<1x32xf32>
    %32 = vector.broadcast %31 : vector<1x32xf32> to vector<8x32xf32>
    %33 = arith.addf %30, %32 : vector<8x32xf32>
    %cst_17 = arith.constant 0.000000e+00 : f32
    %34 = vector.broadcast %cst_17 : f32 to vector<8x32xf32>
    %35 = arith.maximumf %33, %34 : vector<8x32xf32>
    %36 = arith.truncf %35 : vector<8x32xf32> to vector<8x32xbf16>
    %c160 = arith.constant 160 : index
    %c0_18 = arith.constant 0 : index
    %37 = vector.load %arg2[%c160, %c0_18] : memref<192x128xbf16, #tpu.memory_space<vmem>>, vector<32x8xbf16>
    %cst_19 = arith.constant dense<0.000000e+00> : vector<8x8xf32>
    %38 = tpu.matmul %36, %37, %cst_19 {dimension_numbers = #tpu.dot_dimension_numbers<[1], [0], [0], [1], [0, 0, 1, 1], [], []>} : vector<8x32xbf16>, vector<32x8xbf16>, vector<8x8xf32> -> vector<8x8xf32>
    %c4 = arith.constant 4 : index
    %c0_20 = arith.constant 0 : index
    %39 = vector.load %arg3[%c4, %c0_20] : memref<8x128xf32, #tpu.memory_space<vmem>>, vector<1x8xf32>
    %40 = vector.broadcast %39 : vector<1x8xf32> to vector<8x8xf32>
    %41 = arith.addf %38, %40 : vector<8x8xf32>
    %c0_21 = arith.constant 0 : index
    %c0_22 = arith.constant 0 : index
    %42 = vector.load %arg4[%c0_21, %c0_22] : memref<8x8xf32, #tpu.memory_space<vmem>>, vector<8x8xf32>
    tpu.vector_store %arg4[%c0_21, %c0_22], %41 {strides = array<i32>} : memref<8x8xf32, #tpu.memory_space<vmem>>, vector<8x8xf32>,
    return
  }
  func.func @transform_0(%arg0: i32) -> (i32, i32) {
    %c0_i32 = arith.constant 0 : i32
    %c0_i32_0 = arith.constant 0 : i32
    return %arg0, %c0_i32 : i32, i32
  }
  func.func @transform_1(%arg0: i32) -> (i32, i32) {
    %c0_i32 = arith.constant 0 : i32
    %c0_i32_0 = arith.constant 0 : i32
    %c0_i32_1 = arith.constant 0 : i32
    return %c0_i32, %c0_i32_0 : i32, i32
  }
  func.func @transform_2(%arg0: i32) -> (i32, i32) {
    %c0_i32 = arith.constant 0 : i32
    %c0_i32_0 = arith.constant 0 : i32
    %c0_i32_1 = arith.constant 0 : i32
    return %c0_i32, %c0_i32_0 : i32, i32
  }
  func.func @transform_3(%arg0: i32) -> (i32, i32) {
    %c0_i32 = arith.constant 0 : i32
    %c0_i32_0 = arith.constant 0 : i32
    return %arg0, %c0_i32 : i32, i32
  }
}

</mosaic_0001>

<llo_original>
// kernel: tpu_custom_call.1
$region0: #{tpu_custom_call.1}
  #allocation0 [shape = 'u32[]', space=smem, size = 0x4, offset = 0x4, fixed_abs, tag = 'smem constant byte address 0x4 - core index']
  #allocation1 [shape = 'u32[144,128]{1,0:T(1,128)}', space=vmem, size = 0x12000, scoped, tag = 'internal scratch']
  %s0 = inlined_call_operand.hbm [shape: f32[8,12], index: 0, kind: input, shape index: {}]
  %s1 = inlined_call_operand.hbm [shape: bf16[192,128], index: 1, kind: input, shape index: {}]
  %s2 = inlined_call_operand.hbm [shape: f32[8,128], index: 2, kind: input, shape index: {}]
  %s3 = inlined_call_operand.hbm [shape: f32[8,8], index: 3, kind: output, shape index: {}]
  %s4 = sld [smem:[#allocation0]]
  $region34: #{tpu_custom_call.1} parent=0
    _
  %s6 = ssub.s32 1, %s4
  %s7 = scalar_select 0, %s6, %s4
  $region1: #{tpu_custom_call.1} parent=0
    #allocation2 [shape = 'u8[4096]{0}', space=vmem, size = 0x1000, scoped, tag = 'input window, operand 0, single buffered']
    #allocation3 [shape = 's32[1]{0}', space=sflag, size = 0x4, scoped, tag = 'scoped memory for tpu_custom_call.1']
    #allocation4 [shape = 's32[1]{0}', space=sflag, size = 0x4, scoped, tag = 'scoped memory for tpu_custom_call.1']
    #allocation5 [shape = 'u8[49152]{0}', space=vmem, size = 0xc000, scoped, tag = 'input window, operand 1, single buffered']
    #allocation6 [shape = 's32[1]{0}', space=sflag, size = 0x4, scoped, tag = 'scoped memory for tpu_custom_call.1']
    #allocation7 [shape = 'u8[4096]{0}', space=vmem, size = 0x1000, scoped, tag = 'input window, operand 2, single buffered']
    #allocation8 [shape = 'u8[4096]{0}', space=vmem, size = 0x1000, scoped, tag = 'output window, operand 0, single buffered']
    %8 = vsyncpa [#allocation3], 0
    %9 = vsyncpa [#allocation6], 0
    %10 = vsyncpa [#allocation4], 0
    // Predicated region
    $region2: #{tpu_custom_call.1} parent=1 // pred_check
      _
    $region3: #{tpu_custom_call.1} parent=1 // pred_check_branch
      %12 = sbr.rel (0) target = $region5
    $region4: #{tpu_custom_call.1} parent=1 // pred_region
      %s14 = ssub.s32 128, 128
      %15 = vsyncadd [#allocation3], %s14
      %s17 = sshll.u32 [#allocation2], 4
      %s18 = int_to_ptr.vmem [resolvable:$true] %s17
      %20 = dma.hbm_to_vmem [thread:$0]  %s0, 128, %s18, [#allocation3]
    $region5: #{tpu_custom_call.1} parent=1 // pred_fallthru
      _
    // Predicated region
    $region6: #{tpu_custom_call.1} parent=1 // pred_check
      _
    $region7: #{tpu_custom_call.1} parent=1 // pred_check_branch
      %22 = sbr.rel (0) target = $region9
    $region8: #{tpu_custom_call.1} parent=1 // pred_region
      %s24 = ssub.s32 1536, 1536
      %25 = vsyncadd [#allocation6], %s24
      %s26 = sshll.u32 [#allocation5], 4
      %s27 = int_to_ptr.vmem [resolvable:$true] %s26
      %32 = dma.hbm_to_vmem [thread:$0]  %s1, 1536, %s27, [#allocation6], 64, 64, 4
    $region9: #{tpu_custom_call.1} parent=1 // pred_fallthru
      _
    // Predicated region
    $region10: #{tpu_custom_call.1} parent=1 // pred_check
      _
    $region11: #{tpu_custom_call.1} parent=1 // pred_check_branch
      %34 = sbr.rel (0) target = $region13
    $region12: #{tpu_custom_call.1} parent=1 // pred_region
      %s36 = ssub.s32 128, 128
      %37 = vsyncadd [#allocation6], %s36
      %s39 = sshll.u32 [#allocation7], 4
      %s40 = int_to_ptr.vmem [resolvable:$true] %s39
      %42 = dma.hbm_to_vmem [thread:$0]  %s2, 128, %s40, [#allocation6]
    $region13: #{tpu_custom_call.1} parent=1 // pred_fallthru
      _
    // Predicated region
    $region14: #{tpu_custom_call.1} parent=1 // pred_check
      _
    $region15: #{tpu_custom_call.1} parent=1 // pred_check_branch
      %44 = sbr.rel (0) target = $region17
    $region16: #{tpu_custom_call.1} parent=1 // pred_region
      %45 = dma.done [#allocation3], 128
    $region17: #{tpu_custom_call.1} parent=1 // pred_fallthru
      _
    // Predicated region
    $region18: #{tpu_custom_call.1} parent=1 // pred_check
      _
    $region19: #{tpu_custom_call.1} parent=1 // pred_check_branch
      %47 = sbr.rel (0) target = $region21
    $region20: #{tpu_custom_call.1} parent=1 // pred_region
      %48 = dma.done [#allocation6], 1536
    $region21: #{tpu_custom_call.1} parent=1 // pred_fallthru
      _
    // Predicated region
    $region22: #{tpu_custom_call.1} parent=1 // pred_check
      _
    $region23: #{tpu_custom_call.1} parent=1 // pred_check_branch
      %50 = sbr.rel (0) target = $region25
    $region24: #{tpu_custom_call.1} parent=1 // pred_region
      %51 = dma.done [#allocation6], 128
    $region25: #{tpu_custom_call.1} parent=1 // pred_fallthru
      _
    %v53 = vld [vmem:[#allocation2] sm:$0xff]
    %v54 = vpack.c.bf16 %v53, %v53
    %v55 = vld [vmem:[#allocation5] sm:$0xf]
    %v56 = vld [vmem:[#allocation5 + $0x4] sm:$0x3]
    %v57 = vld [vmem:[#allocation7] sm:$0x1]
    %v58 = vlaneseq
    %v59 = vshrl.u32 %v58, 7
    %v60 = vsub.s32 0, %v59
    %v61 = vrot.slane %v57, %v60
    %v64 = vunpack.c.l.b16 %v55
    %v65 = vunpack.c.l.b16 %v56
    %v66 = vpack.c.b16 %v65, %v64
    %vm67 = vcmask 97280
    %v69 = vsel %vm67, %v54, 0
    %vm71 = vcmask 1045504
    %v73 = vsel %vm71, %v66, 0
    %75 = vmatprep.subr.bf16.mxu0 0
    %76 = vmatpush1.bf16.msra.mxu0 %v73
    %77 = vmatprep.subr.bf16.mxu0 0
    %78 = vmatpush1.bf16.msra.mxu0 0
    %79 = vmatprep.subr.bf16.mxu0 0
    %80 = vmatpush1.bf16.msra.mxu0 0
    %81 = vmatprep.subr.bf16.mxu0 0
    %82 = vmatpush1.bf16.msra.mxu0 0
    %83 = vmatprep.subr.bf16.mxu0 0
    %84 = vmatpush1.bf16.msra.mxu0 0
    %85 = vmatprep.subr.bf16.mxu0 0
    %86 = vmatpush1.bf16.msra.mxu0 0
    %87 = vmatprep.subr.bf16.mxu0 0
    %88 = vmatpush1.bf16.msra.mxu0 0
    %89 = vmatprep.subr.bf16.mxu0 0
    %90 = vmatpush1.bf16.msra.mxu0 0
    %91 = vmatprep.subr.bf16.mxu0 0
    %92 = vmatpush1.bf16.msra.mxu0 0
    %93 = vmatprep.subr.bf16.mxu0 0
    %94 = vmatpush1.bf16.msra.mxu0 0
    %95 = vmatprep.subr.bf16.mxu0 0
    %96 = vmatpush1.bf16.msra.mxu0 0
    %97 = vmatprep.subr.bf16.mxu0 0
    %98 = vmatpush1.bf16.msra.mxu0 0
    %99 = vmatprep.subr.bf16.mxu0 0
    %100 = vmatpush1.bf16.msra.mxu0 0
    %101 = vmatprep.subr.bf16.mxu0 0
    %102 = vmatpush1.bf16.msra.mxu0 0
    %103 = vmatprep.subr.bf16.mxu0 0
    %104 = vmatpush1.bf16.msra.mxu0 0
    %105 = vmatprep.subr.bf16.mxu0 0
    %106 = vmatpush1.bf16.msra.mxu0 0
    %107 = vmatprep.mubr.bf16.mxu0 0
    %108 = vmatmul.mubr.bf16.gmra.mrb[0].mxu0 %v69
    %v109 = vpop.f32.mrb[0].mxu0
    %v110 = vadd.f32 %v61, %v109
    %v111 = vpop.f32.mrb[0].mxu0
    %v112 = vpop.f32.mrb[0].mxu0
    %v113 = vpop.f32.mrb[0].mxu0
    %114 = vdwg.mxu0
    %v115 = vpack.c.bf16 %v110, %v110
    %v116 = vld [vmem:[#allocation5 + $0x8] sm:$0xf]
    %v117 = vld [vmem:[#allocation5 + $0xc] sm:$0xf]
    %v118 = vld [vmem:[#allocation5 + $0x10] sm:$0xf]
    %v119 = vld [vmem:[#allocation5 + $0x14] sm:$0xf]
    %v120 = vld [vmem:[#allocation5 + $0x18] sm:$0xf]
    %v121 = vld [vmem:[#allocation5 + $0x1c] sm:$0xf]
    %v122 = vld [vmem:[#allocation5 + $0x20] sm:$0xf]
    %v123 = vld [vmem:[#allocation5 + $0x24] sm:$0xf]
    %v124 = vld [vmem:[#allocation7 + $0x1] sm:$0x1]
    %v125 = vlaneseq
    %v126 = vshrl.u32 %v125, 7
    %v127 = vsub.s32 0, %v126
    %v128 = vrot.slane %v124, %v127
    %v137 = vunpack.c.l.b16 %v116
    %v138 = vunpack.c.l.b16 %v117
    %v139 = vunpack.c.l.b16 %v118
    %v140 = vunpack.c.l.b16 %v119
    %v141 = vunpack.c.l.b16 %v120
    %v142 = vunpack.c.l.b16 %v121
    %v143 = vunpack.c.l.b16 %v122
    %v144 = vunpack.c.l.b16 %v123
    %v145 = vpack.c.b16 %v138, %v137
    %v146 = vpack.c.b16 %v140, %v139
    %v147 = vpack.c.b16 %v142, %v141
    %v148 = vpack.c.b16 %v144, %v143
    %vm153 = vcmask 523264
    %v155 = vsel %vm153, %v115, 0
    %157 = vmatprep.subr.bf16.mxu0 0
    %158 = vmatpush1.bf16.msra.mxu0 %v145
    %159 = vmatprep.subr.bf16.mxu0 0
    %160 = vmatpush1.bf16.msra.mxu0 %v146
    %161 = vmatprep.subr.bf16.mxu0 0
    %162 = vmatpush1.bf16.msra.mxu0 %v147
    %163 = vmatprep.subr.bf16.mxu0 0
    %164 = vmatpush1.bf16.msra.mxu0 %v148
    %165 = vmatprep.subr.bf16.mxu0 0
    %166 = vmatpush1.bf16.msra.mxu0 0
    %167 = vmatprep.subr.bf16.mxu0 0
    %168 = vmatpush1.bf16.msra.mxu0 0
    %169 = vmatprep.subr.bf16.mxu0 0
    %170 = vmatpush1.bf16.msra.mxu0 0
    %171 = vmatprep.subr.bf16.mxu0 0
    %172 = vmatpush1.bf16.msra.mxu0 0
    %173 = vmatprep.subr.bf16.mxu0 0
    %174 = vmatpush1.bf16.msra.mxu0 0
    %175 = vmatprep.subr.bf16.mxu0 0
    %176 = vmatpush1.bf16.msra.mxu0 0
    %177 = vmatprep.subr.bf16.mxu0 0
    %178 = vmatpush1.bf16.msra.mxu0 0
    %179 = vmatprep.subr.bf16.mxu0 0
    %180 = vmatpush1.bf16.msra.mxu0 0
    %181 = vmatprep.subr.bf16.mxu0 0
    %182 = vmatpush1.bf16.msra.mxu0 0
    %183 = vmatprep.subr.bf16.mxu0 0
    %184 = vmatpush1.bf16.msra.mxu0 0
    %185 = vmatprep.subr.bf16.mxu0 0
    %186 = vmatpush1.bf16.msra.mxu0 0
    %187 = vmatprep.subr.bf16.mxu0 0
    %188 = vmatpush1.bf16.msra.mxu0 0
    %189 = vmatprep.mubr.bf16.mxu0 0
    %190 = vmatmul.mubr.bf16.gmra.mrb[0].mxu0 %v155
    %v191 = vpop.f32.mrb[0].mxu0
    %v192 = vadd.f32 %v128, %v191
    %v193 = vpop.f32.mrb[0].mxu0
    %v194 = vpop.f32.mrb[0].mxu0
    %v195 = vpop.f32.mrb[0].mxu0
    %196 = vdwg.mxu0
    %198 = vrot.lane.b32.xlu0 %v192, 96
    %v199 = vpop.permute.xlu0 %198
    %v201 = vmul.f32 %v192, %v199
    %v202 = vld [vmem:[#allocation5 + $0x28] sm:$0xf]
    %v203 = vld [vmem:[#allocation5 + $0x2c] sm:$0x3]
    %v204 = vpack.c.bf16 %v201, %v201
    %v205 = vld [vmem:[#allocation5 + $0x30] sm:$0xf]
    %v206 = vld [vmem:[#allocation5 + $0x34] sm:$0xf]
    %v207 = vld [vmem:[#allocation5 + $0x38] sm:$0xf]
    %v208 = vld [vmem:[#allocation5 + $0x3c] sm:$0xf]
    %v213 = vunpack.c.l.b16 %v205
    %v214 = vunpack.c.l.b16 %v206
    %v215 = vunpack.c.l.b16 %v207
    %v216 = vunpack.c.l.b16 %v208
    %v217 = vpack.c.b16 %v214, %v213
    %v218 = vpack.c.b16 %v216, %v215
    %vm221 = vcmask 261120
    %v223 = vsel %vm221, %v204, 0
    %225 = vmatprep.subr.bf16.mxu0 0
    %226 = vmatpush1.bf16.msra.mxu0 %v217
    %227 = vmatprep.subr.bf16.mxu0 0
    %228 = vmatpush1.bf16.msra.mxu0 %v218
    %229 = vmatprep.subr.bf16.mxu0 0
    %230 = vmatpush1.bf16.msra.mxu0 0
    %231 = vmatprep.subr.bf16.mxu0 0
    %232 = vmatpush1.bf16.msra.mxu0 0
    %233 = vmatprep.subr.bf16.mxu0 0
    %234 = vmatpush1.bf16.msra.mxu0 0
    %235 = vmatprep.subr.bf16.mxu0 0
    %236 = vmatpush1.bf16.msra.mxu0 0
    %237 = vmatprep.subr.bf16.mxu0 0
    %238 = vmatpush1.bf16.msra.mxu0 0
    %239 = vmatprep.subr.bf16.mxu0 0
    %240 = vmatpush1.bf16.msra.mxu0 0
    %241 = vmatprep.subr.bf16.mxu0 0
    %242 = vmatpush1.bf16.msra.mxu0 0
    %243 = vmatprep.subr.bf16.mxu0 0
    %244 = vmatpush1.bf16.msra.mxu0 0
    %245 = vmatprep.subr.bf16.mxu0 0
    %246 = vmatpush1.bf16.msra.mxu0 0
    %247 = vmatprep.subr.bf16.mxu0 0
    %248 = vmatpush1.bf16.msra.mxu0 0
    %249 = vmatprep.subr.bf16.mxu0 0
    %250 = vmatpush1.bf16.msra.mxu0 0
    %251 = vmatprep.subr.bf16.mxu0 0
    %252 = vmatpush1.bf16.msra.mxu0 0
    %253 = vmatprep.subr.bf16.mxu0 0
    %254 = vmatpush1.bf16.msra.mxu0 0
    %255 = vmatprep.subr.bf16.mxu0 0
    %256 = vmatpush1.bf16.msra.mxu0 0
    %257 = vmatprep.mubr.bf16.mxu0 0
    %258 = vmatmul.mubr.bf16.gmra.mrb[0].mxu0 %v223
    %v259 = vpop.f32.mrb[0].mxu0
    %v260 = vadd.f32 0.0, %v259
    %v261 = vpop.f32.mrb[0].mxu0
    %v262 = vpop.f32.mrb[0].mxu0
    %v263 = vpop.f32.mrb[0].mxu0
    %264 = vdwg.mxu0
    %v267 = vunpack.c.l.b16 %v202
    %v268 = vunpack.c.l.b16 %v203
    %v269 = vpack.c.b16 %v268, %v267
    %v271 = vsel %vm71, %v269, 0
    %273 = vmatprep.subr.bf16.mxu0 0
    %274 = vmatpush1.bf16.msra.mxu0 %v271
    %275 = vmatprep.subr.bf16.mxu0 0
    %276 = vmatpush1.bf16.msra.mxu0 0
    %277 = vmatprep.subr.bf16.mxu0 0
    %278 = vmatpush1.bf16.msra.mxu0 0
    %279 = vmatprep.subr.bf16.mxu0 0
    %280 = vmatpush1.bf16.msra.mxu0 0
    %281 = vmatprep.subr.bf16.mxu0 0
    %282 = vmatpush1.bf16.msra.mxu0 0
    %283 = vmatprep.subr.bf16.mxu0 0
    %284 = vmatpush1.bf16.msra.mxu0 0
    %285 = vmatprep.subr.bf16.mxu0 0
    %286 = vmatpush1.bf16.msra.mxu0 0
    %287 = vmatprep.subr.bf16.mxu0 0
    %288 = vmatpush1.bf16.msra.mxu0 0
    %289 = vmatprep.subr.bf16.mxu0 0
    %290 = vmatpush1.bf16.msra.mxu0 0
    %291 = vmatprep.subr.bf16.mxu0 0
    %292 = vmatpush1.bf16.msra.mxu0 0
    %293 = vmatprep.subr.bf16.mxu0 0
    %294 = vmatpush1.bf16.msra.mxu0 0
    %295 = vmatprep.subr.bf16.mxu0 0
    %296 = vmatpush1.bf16.msra.mxu0 0
    %297 = vmatprep.subr.bf16.mxu0 0
    %298 = vmatpush1.bf16.msra.mxu0 0
    %299 = vmatprep.subr.bf16.mxu0 0
    %300 = vmatpush1.bf16.msra.mxu0 0
    %301 = vmatprep.subr.bf16.mxu0 0
    %302 = vmatpush1.bf16.msra.mxu0 0
    %303 = vmatprep.subr.bf16.mxu0 0
    %304 = vmatpush1.bf16.msra.mxu0 0
    %305 = vmatprep.mubr.bf16.mxu0 0
    %306 = vmatmul.mubr.bf16.gmra.mrb[0].mxu0 %v69
    %v307 = vpop.f32.mrb[0].mxu0
    %v308 = vadd.f32 %v260, %v307
    %v309 = vpop.f32.mrb[0].mxu0
    %v310 = vpop.f32.mrb[0].mxu0
    %v311 = vpop.f32.mrb[0].mxu0
    %312 = vdwg.mxu0
    %v313 = vld [vmem:[#allocation7 + $0x2] sm:$0x1]
    %v314 = vlaneseq
    %v315 = vshrl.u32 %v314, 7
    %v316 = vsub.s32 0, %v315
    %v317 = vrot.slane %v313, %v316
    %v318 = vadd.f32 %v308, %v317
    %v319 = vmax.f32 %v318, 0.0
    %v320 = vpack.c.bf16 %v319, %v319
    %v321 = vld [vmem:[#allocation5 + $0x40] sm:$0xf]
    %v322 = vld [vmem:[#allocation5 + $0x44] sm:$0xf]
    %v323 = vld [vmem:[#allocation5 + $0x48] sm:$0xf]
    %v324 = vld [vmem:[#allocation5 + $0x4c] sm:$0xf]
    %v325 = vld [vmem:[#allocation7 + $0x3] sm:$0x1]
    %v326 = vlaneseq
    %v327 = vshrl.u32 %v326, 7
    %v328 = vsub.s32 0, %v327
    %v329 = vrot.slane %v325, %v328
    %v334 = vunpack.c.l.b16 %v321
    %v335 = vunpack.c.l.b16 %v322
    %v336 = vunpack.c.l.b16 %v323
    %v337 = vunpack.c.l.b16 %v324
    %v338 = vpack.c.b16 %v335, %v334
    %v339 = vpack.c.b16 %v337, %v336
    %v343 = vsel %vm221, %v320, 0
    %345 = vmatprep.subr.bf16.mxu0 0
    %346 = vmatpush1.bf16.msra.mxu0 %v338
    %347 = vmatprep.subr.bf16.mxu0 0
    %348 = vmatpush1.bf16.msra.mxu0 %v339
    %349 = vmatprep.subr.bf16.mxu0 0
    %350 = vmatpush1.bf16.msra.mxu0 0
    %351 = vmatprep.subr.bf16.mxu0 0
    %352 = vmatpush1.bf16.msra.mxu0 0
    %353 = vmatprep.subr.bf16.mxu0 0
    %354 = vmatpush1.bf16.msra.mxu0 0
    %355 = vmatprep.subr.bf16.mxu0 0
    %356 = vmatpush1.bf16.msra.mxu0 0
    %357 = vmatprep.subr.bf16.mxu0 0
    %358 = vmatpush1.bf16.msra.mxu0 0
    %359 = vmatprep.subr.bf16.mxu0 0
    %360 = vmatpush1.bf16.msra.mxu0 0
    %361 = vmatprep.subr.bf16.mxu0 0
    %362 = vmatpush1.bf16.msra.mxu0 0
    %363 = vmatprep.subr.bf16.mxu0 0
    %364 = vmatpush1.bf16.msra.mxu0 0
    %365 = vmatprep.subr.bf16.mxu0 0
    %366 = vmatpush1.bf16.msra.mxu0 0
    %367 = vmatprep.subr.bf16.mxu0 0
    %368 = vmatpush1.bf16.msra.mxu0 0
    %369 = vmatprep.subr.bf16.mxu0 0
    %370 = vmatpush1.bf16.msra.mxu0 0
    %371 = vmatprep.subr.bf16.mxu0 0
    %372 = vmatpush1.bf16.msra.mxu0 0
    %373 = vmatprep.subr.bf16.mxu0 0
    %374 = vmatpush1.bf16.msra.mxu0 0
    %375 = vmatprep.subr.bf16.mxu0 0
    %376 = vmatpush1.bf16.msra.mxu0 0
    %377 = vmatprep.mubr.bf16.mxu0 0
    %378 = vmatmul.mubr.bf16.gmra.mrb[0].mxu0 %v343
    %v379 = vpop.f32.mrb[0].mxu0
    %v380 = vadd.f32 %v329, %v379
    %v381 = vpop.f32.mrb[0].mxu0
    %v382 = vpop.f32.mrb[0].mxu0
    %v383 = vpop.f32.mrb[0].mxu0
    %384 = vdwg.mxu0
    %v385 = vmax.f32 %v380, 0.0
    %v386 = vpack.c.bf16 %v385, %v385
    %v387 = vld [vmem:[#allocation5 + $0x50] sm:$0xf]
    %v388 = vld [vmem:[#allocation5 + $0x54] sm:$0xf]
    %v389 = vld [vmem:[#allocation5 + $0x58] sm:$0xf]
    %v390 = vld [vmem:[#allocation5 + $0x5c] sm:$0xf]
    %v391 = vld [vmem:[#allocation7 + $0x4] sm:$0x1]
    %v392 = vlaneseq
    %v393 = vshrl.u32 %v392, 7
    %v394 = vsub.s32 0, %v393
    %v395 = vrot.slane %v391, %v394
    %v400 = vunpack.c.l.b16 %v387
    %v401 = vunpack.c.l.b16 %v388
    %v402 = vunpack.c.l.b16 %v389
    %v403 = vunpack.c.l.b16 %v390
    %v404 = vpack.c.b16 %v401, %v400
    %v405 = vpack.c.b16 %v403, %v402
    %v409 = vsel %vm221, %v386, 0
    %411 = vmatprep.subr.bf16.mxu0 0
    %412 = vmatpush1.bf16.msra.mxu0 %v404
    %413 = vmatprep.subr.bf16.mxu0 0
    %414 = vmatpush1.bf16.msra.mxu0 %v405
    %415 = vmatprep.subr.bf16.mxu0 0
    %416 = vmatpush1.bf16.msra.mxu0 0
    %417 = vmatprep.subr.bf16.mxu0 0
    %418 = vmatpush1.bf16.msra.mxu0 0
    %419 = vmatprep.subr.bf16.mxu0 0
    %420 = vmatpush1.bf16.msra.mxu0 0
    %421 = vmatprep.subr.bf16.mxu0 0
    %422 = vmatpush1.bf16.msra.mxu0 0
    %423 = vmatprep.subr.bf16.mxu0 0
    %424 = vmatpush1.bf16.msra.mxu0 0
    %425 = vmatprep.subr.bf16.mxu0 0
    %426 = vmatpush1.bf16.msra.mxu0 0
    %427 = vmatprep.subr.bf16.mxu0 0
    %428 = vmatpush1.bf16.msra.mxu0 0
    %429 = vmatprep.subr.bf16.mxu0 0
    %430 = vmatpush1.bf16.msra.mxu0 0
    %431 = vmatprep.subr.bf16.mxu0 0
    %432 = vmatpush1.bf16.msra.mxu0 0
    %433 = vmatprep.subr.bf16.mxu0 0
    %434 = vmatpush1.bf16.msra.mxu0 0
    %435 = vmatprep.subr.bf16.mxu0 0
    %436 = vmatpush1.bf16.msra.mxu0 0
    %437 = vmatprep.subr.bf16.mxu0 0
    %438 = vmatpush1.bf16.msra.mxu0 0
    %439 = vmatprep.subr.bf16.mxu0 0
    %440 = vmatpush1.bf16.msra.mxu0 0
    %441 = vmatprep.subr.bf16.mxu0 0
    %442 = vmatpush1.bf16.msra.mxu0 0
    %443 = vmatprep.mubr.bf16.mxu0 0
    %444 = vmatmul.mubr.bf16.gmra.mrb[0].mxu0 %v409
    %v445 = vpop.f32.mrb[0].mxu0
    %v446 = vadd.f32 %v395, %v445
    %v447 = vpop.f32.mrb[0].mxu0
    %v448 = vpop.f32.mrb[0].mxu0
    %v449 = vpop.f32.mrb[0].mxu0
    %450 = vdwg.mxu0
    %vm451 = vcmask 64512
    %452 = vst.msk [vmem:[#allocation8] sm:$0xff] %vm451, %v446
    // Predicated region
    $region26: #{tpu_custom_call.1} parent=1 // pred_check
      _
    $region27: #{tpu_custom_call.1} parent=1 // pred_check_branch
      %454 = sbr.rel (0) target = $region29
    $region28: #{tpu_custom_call.1} parent=1 // pred_region
      %s456 = ssub.s32 128, 128
      %457 = vsyncadd [#allocation4], %s456
      %s459 = sshll.u32 [#allocation8], 4
      %s460 = int_to_ptr.vmem [resolvable:$true] %s459
      %462 = dma.vmem_to_hbm [thread:$0]  %s460, 128, %s3, [#allocation4]
    $region29: #{tpu_custom_call.1} parent=1 // pred_fallthru
      _
    // Predicated region
    $region30: #{tpu_custom_call.1} parent=1 // pred_check
      _
    $region31: #{tpu_custom_call.1} parent=1 // pred_check_branch
      %464 = sbr.rel (0) target = $region33
    $region32: #{tpu_custom_call.1} parent=1 // pred_region
      %465 = dma.done [#allocation4], 128
    $region33: #{tpu_custom_call.1} parent=1 // pred_fallthru
      _
    %466 = vsyncpa [#allocation3], 1
    %467 = vsyncpa [#allocation6], 1
    %468 = vsyncpa [#allocation4], 1

</llo_original>
